<compile_context>
chip_gen: v7x
topology: tpu7x:2x2x1
jax: 0.10.0
libtpu: 0.0.40
codegen_flags: <defaults>
</compile_context>

<pallas_src>
import jax
import jax.numpy as jnp
from jax.experimental import pallas as pl
from jax.experimental.pallas import tpu as pltpu


_LANE_WIDTH = 512                      # lane-dense block width (multiple of 128)
_BUDGET_BYTES = 20 * 1024 * 1024       # double-buffered resident VMEM budget
_VMEM_LIMIT_BYTES = 32 * 1024 * 1024   # scoped VMEM limit (safe on v5e/v6e/v7x)


def _add_kernel(*refs):
    """refs = (*input_refs, out_ref). Elementwise sum of all inputs into out."""
    out_ref = refs[-1]
    acc = refs[0][...]
    for r in refs[1:-1]:
        acc = acc + r[...]
    out_ref[...] = acc


def _choose_row_tile(R, C, n_bufs, itemsize, sublane_q, budget_bytes=_BUDGET_BYTES):
    """Row tile (multiple of the dtype sublane quantum) such that the
    double-buffered resident footprint 2 * n_bufs * TR * C * itemsize stays
    within budget_bytes, capped at R, and shrunk (if possible) so the grid has
    at least 2 steps for megacore sharding on v7x."""
    max_rows = budget_bytes // max(1, 2 * n_bufs * C * itemsize)
    tr = max(sublane_q, (max_rows // sublane_q) * sublane_q)
    tr = min(tr, R)  # R is always a multiple of sublane_q (see wrapper padding)
    if pl.cdiv(R, tr) < 2 and R > sublane_q:
        half = (((R + 1) // 2) + sublane_q - 1) // sublane_q * sublane_q
        tr = max(sublane_q, min(tr, half))
    return tr


def add_pallas(inputs):
    """Pallas TPU implementation of `sum(inputs)` (all inputs same shape/dtype)."""
    inputs = list(inputs)
    x0 = inputs[0]
    assert all(x.shape == x0.shape and x.dtype == x0.dtype for x in inputs)
    orig_shape = x0.shape
    dtype = x0.dtype

    total = 1
    for d in orig_shape:
        total *= d
    if total == 0:  # degenerate empty tensor: nothing to do on-device
        out = inputs[0]
        for x in inputs[1:]:
            out = out + x
        return out

    itemsize = jnp.dtype(dtype).itemsize
    # Sublane quantum: 8 for f32, 16 for bf16, 32 for int8/fp8.
    sublane_q = max(8, 32 // itemsize)
    C = _LANE_WIDTH

    # Pad the flat length to a multiple of C * sublane_q so the (R, C) view has
    # R a multiple of the sublane quantum (block shape always (8,128)-aligned).
    chunk = C * sublane_q
    padded_total = pl.cdiv(total, chunk) * chunk
    R = padded_total // C
    pad = padded_total - total

    n_bufs = len(inputs) + 1  # inputs + output resident per grid step
    TR = _choose_row_tile(R, C, n_bufs, itemsize, sublane_q)
    grid = (pl.cdiv(R, TR),)

    flat = []
    for x in inputs:
        xf = x.reshape(-1)
        if pad:
            xf = jnp.pad(xf, (0, pad))
        flat.append(xf.reshape(R, C))

    out = pl.pallas_call(
        _add_kernel,
        out_shape=jax.ShapeDtypeStruct((R, C), dtype),
        grid=grid,
        in_specs=[pl.BlockSpec((TR, C), lambda i: (i, 0)) for _ in flat],
        out_specs=pl.BlockSpec((TR, C), lambda i: (i, 0)),
        compiler_params=pltpu.CompilerParams(
            dimension_semantics=("parallel",),
            vmem_limit_bytes=_VMEM_LIMIT_BYTES,
        ),
    )(*flat)

    out_flat = out.reshape(-1)
    if pad:
        out_flat = out_flat[:total]
    return out_flat.reshape(orig_shape)


if __name__ == "__main__":
    key = jax.random.PRNGKey(0)
    k1, k2, k3 = jax.random.split(key, 3)

    # Three same-shaped NCHW inputs (Add requires identical shapes).
    shape = (2, 4, 16, 16)
    x1 = jax.random.normal(k1, shape, dtype=jnp.float32)
    x2 = jax.random.normal(k2, shape, dtype=jnp.float32)
    x3 = jax.random.normal(k3, shape, dtype=jnp.float32)

    out = add_pallas([x1, x2, x3])
    out = jax.block_until_ready(out)

    ref = x1 + x2 + x3
    assert out.shape == shape, out.shape
    assert jnp.allclose(out, ref, atol=0.0, rtol=0.0), "mismatch vs x1+x2+x3 reference"

    print("KERNEL_OK")
</pallas_src>

<mosaic_0001>
module attributes {stable_mosaic.version = 11 : i64} {
  func.func @_add_kernel(%arg0: i32, %arg1: memref<8x512xf32, #tpu.memory_space<vmem>>, %arg2: memref<8x512xf32, #tpu.memory_space<vmem>>, %arg3: memref<8x512xf32, #tpu.memory_space<vmem>>, %arg4: memref<8x512xf32, #tpu.memory_space<vmem>>) attributes {dimension_semantics = [#tpu.dimension_semantics<parallel>], iteration_bounds = array<i64: 1>, scalar_prefetch = 0 : i64, scratch_operands = 0 : i64, tpu.core_type = #tpu.core_type<tc>, window_params = [{transform_indices = @transform_0, window_bounds = array<i64: 8, 512>}, {transform_indices = @transform_1, window_bounds = array<i64: 8, 512>}, {transform_indices = @transform_2, window_bounds = array<i64: 8, 512>}, {transform_indices = @transform_3, window_bounds = array<i64: 8, 512>}]} {
    %c0 = arith.constant 0 : index
    %c0_0 = arith.constant 0 : index
    %0 = vector.load %arg1[%c0, %c0_0] : memref<8x512xf32, #tpu.memory_space<vmem>>, vector<8x512xf32>
    %c0_1 = arith.constant 0 : index
    %c0_2 = arith.constant 0 : index
    %1 = vector.load %arg2[%c0_1, %c0_2] : memref<8x512xf32, #tpu.memory_space<vmem>>, vector<8x512xf32>
    %2 = arith.addf %0, %1 : vector<8x512xf32>
    %c0_3 = arith.constant 0 : index
    %c0_4 = arith.constant 0 : index
    %3 = vector.load %arg3[%c0_3, %c0_4] : memref<8x512xf32, #tpu.memory_space<vmem>>, vector<8x512xf32>
    %4 = arith.addf %2, %3 : vector<8x512xf32>
    %c0_5 = arith.constant 0 : index
    %c0_6 = arith.constant 0 : index
    %5 = vector.load %arg4[%c0_5, %c0_6] : memref<8x512xf32, #tpu.memory_space<vmem>>, vector<8x512xf32>
    tpu.vector_store %arg4[%c0_5, %c0_6], %4 {strides = array<i32>} : memref<8x512xf32, #tpu.memory_space<vmem>>, vector<8x512xf32>,
    return
  }
  func.func @transform_0(%arg0: i32) -> (i32, i32) {
    %c0_i32 = arith.constant 0 : i32
    %c0_i32_0 = arith.constant 0 : i32
    return %arg0, %c0_i32 : i32, i32
  }
  func.func @transform_1(%arg0: i32) -> (i32, i32) {
    %c0_i32 = arith.constant 0 : i32
    %c0_i32_0 = arith.constant 0 : i32
    return %arg0, %c0_i32 : i32, i32
  }
  func.func @transform_2(%arg0: i32) -> (i32, i32) {
    %c0_i32 = arith.constant 0 : i32
    %c0_i32_0 = arith.constant 0 : i32
    return %arg0, %c0_i32 : i32, i32
  }
  func.func @transform_3(%arg0: i32) -> (i32, i32) {
    %c0_i32 = arith.constant 0 : i32
    %c0_i32_0 = arith.constant 0 : i32
    return %arg0, %c0_i32 : i32, i32
  }
}

</mosaic_0001>

<llo_original>
// kernel: tpu_custom_call.1
$region0: #{tpu_custom_call.1}
  #allocation0 [shape = 'u32[]', space=smem, size = 0x4, offset = 0x4, fixed_abs, tag = 'smem constant byte address 0x4 - core index']
  #allocation1 [shape = 'u32[144,128]{1,0:T(1,128)}', space=vmem, size = 0x12000, scoped, tag = 'internal scratch']
  %s0 = inlined_call_operand.hbm [shape: f32[8,512], index: 0, kind: input, shape index: {}]
  %s1 = inlined_call_operand.hbm [shape: f32[8,512], index: 1, kind: input, shape index: {}]
  %s2 = inlined_call_operand.hbm [shape: f32[8,512], index: 2, kind: input, shape index: {}]
  %s3 = inlined_call_operand.hbm [shape: f32[8,512], index: 3, kind: output, shape index: {}]
  %s4 = sld [smem:[#allocation0]]
  $region34: #{tpu_custom_call.1} parent=0
    _
  %s6 = ssub.s32 1, %s4
  %s7 = scalar_select 0, %s6, %s4
  $region1: #{tpu_custom_call.1} parent=0
    #allocation2 [shape = 'u8[16384]{0}', space=vmem, size = 0x4000, scoped, tag = 'input window, operand 0, single buffered']
    #allocation3 [shape = 's32[1]{0}', space=sflag, size = 0x4, scoped, tag = 'scoped memory for tpu_custom_call.1']
    #allocation4 [shape = 's32[1]{0}', space=sflag, size = 0x4, scoped, tag = 'scoped memory for tpu_custom_call.1']
    #allocation5 [shape = 'u8[16384]{0}', space=vmem, size = 0x4000, scoped, tag = 'input window, operand 1, single buffered']
    #allocation6 [shape = 's32[1]{0}', space=sflag, size = 0x4, scoped, tag = 'scoped memory for tpu_custom_call.1']
    #allocation7 [shape = 'u8[16384]{0}', space=vmem, size = 0x4000, scoped, tag = 'input window, operand 2, single buffered']
    #allocation8 [shape = 'u8[16384]{0}', space=vmem, size = 0x4000, scoped, tag = 'output window, operand 0, single buffered']
    %8 = vsyncpa [#allocation3], 0
    %9 = vsyncpa [#allocation6], 0
    %10 = vsyncpa [#allocation4], 0
    // Predicated region
    $region2: #{tpu_custom_call.1} parent=1 // pred_check
      _
    $region3: #{tpu_custom_call.1} parent=1 // pred_check_branch
      %12 = sbr.rel (0) target = $region5
    $region4: #{tpu_custom_call.1} parent=1 // pred_region
      %s14 = ssub.s32 512, 512
      %15 = vsyncadd [#allocation3], %s14
      %s17 = sshll.u32 [#allocation2], 4
      %s18 = int_to_ptr.vmem [resolvable:$true] %s17
      %20 = dma.hbm_to_vmem [thread:$0]  %s0, 512, %s18, [#allocation3]
    $region5: #{tpu_custom_call.1} parent=1 // pred_fallthru
      _
    // Predicated region
    $region6: #{tpu_custom_call.1} parent=1 // pred_check
      _
    $region7: #{tpu_custom_call.1} parent=1 // pred_check_branch
      %22 = sbr.rel (0) target = $region9
    $region8: #{tpu_custom_call.1} parent=1 // pred_region
      %s24 = ssub.s32 512, 512
      %25 = vsyncadd [#allocation6], %s24
      %s27 = sshll.u32 [#allocation5], 4
      %s28 = int_to_ptr.vmem [resolvable:$true] %s27
      %30 = dma.hbm_to_vmem [thread:$0]  %s1, 512, %s28, [#allocation6]
    $region9: #{tpu_custom_call.1} parent=1 // pred_fallthru
      _
    // Predicated region
    $region10: #{tpu_custom_call.1} parent=1 // pred_check
      _
    $region11: #{tpu_custom_call.1} parent=1 // pred_check_branch
      %32 = sbr.rel (0) target = $region13
    $region12: #{tpu_custom_call.1} parent=1 // pred_region
      %s34 = ssub.s32 512, 512
      %35 = vsyncadd [#allocation6], %s34
      %s37 = sshll.u32 [#allocation7], 4
      %s38 = int_to_ptr.vmem [resolvable:$true] %s37
      %40 = dma.hbm_to_vmem [thread:$0]  %s2, 512, %s38, [#allocation6]
    $region13: #{tpu_custom_call.1} parent=1 // pred_fallthru
      _
    // Predicated region
    $region14: #{tpu_custom_call.1} parent=1 // pred_check
      _
    $region15: #{tpu_custom_call.1} parent=1 // pred_check_branch
      %42 = sbr.rel (0) target = $region17
    $region16: #{tpu_custom_call.1} parent=1 // pred_region
      %43 = dma.done [#allocation3], 512
    $region17: #{tpu_custom_call.1} parent=1 // pred_fallthru
      _
    // Predicated region
    $region18: #{tpu_custom_call.1} parent=1 // pred_check
      _
    $region19: #{tpu_custom_call.1} parent=1 // pred_check_branch
      %45 = sbr.rel (0) target = $region21
    $region20: #{tpu_custom_call.1} parent=1 // pred_region
      %46 = dma.done [#allocation6], 512
    $region21: #{tpu_custom_call.1} parent=1 // pred_fallthru
      _
    // Predicated region
    $region22: #{tpu_custom_call.1} parent=1 // pred_check
      _
    $region23: #{tpu_custom_call.1} parent=1 // pred_check_branch
      %48 = sbr.rel (0) target = $region25
    $region24: #{tpu_custom_call.1} parent=1 // pred_region
      %49 = dma.done [#allocation6], 512
    $region25: #{tpu_custom_call.1} parent=1 // pred_fallthru
      _
    %v50 = vld [vmem:[#allocation2] sm:$0xff]
    %v51 = vld [vmem:[#allocation2 + $0x8] sm:$0xff]
    %v52 = vld [vmem:[#allocation2 + $0x10] sm:$0xff]
    %v53 = vld [vmem:[#allocation2 + $0x18] sm:$0xff]
    %v54 = vld [vmem:[#allocation5] sm:$0xff]
    %v55 = vld [vmem:[#allocation5 + $0x8] sm:$0xff]
    %v56 = vld [vmem:[#allocation5 + $0x10] sm:$0xff]
    %v57 = vld [vmem:[#allocation5 + $0x18] sm:$0xff]
    %v58 = vadd.f32 %v50, %v54
    %v59 = vadd.f32 %v51, %v55
    %v60 = vadd.f32 %v52, %v56
    %v61 = vadd.f32 %v53, %v57
    %v62 = vld [vmem:[#allocation7] sm:$0xff]
    %v63 = vld [vmem:[#allocation7 + $0x8] sm:$0xff]
    %v64 = vld [vmem:[#allocation7 + $0x10] sm:$0xff]
    %v65 = vld [vmem:[#allocation7 + $0x18] sm:$0xff]
    %v66 = vadd.f32 %v58, %v62
    %v67 = vadd.f32 %v59, %v63
    %v68 = vadd.f32 %v60, %v64
    %v69 = vadd.f32 %v61, %v65
    %70 = vst [vmem:[#allocation8] sm:$0xff] %v66
    %71 = vst [vmem:[#allocation8 + $0x8] sm:$0xff] %v67
    %72 = vst [vmem:[#allocation8 + $0x10] sm:$0xff] %v68
    %73 = vst [vmem:[#allocation8 + $0x18] sm:$0xff] %v69
    // Predicated region
    $region26: #{tpu_custom_call.1} parent=1 // pred_check
      _
    $region27: #{tpu_custom_call.1} parent=1 // pred_check_branch
      %75 = sbr.rel (0) target = $region29
    $region28: #{tpu_custom_call.1} parent=1 // pred_region
      %s77 = ssub.s32 512, 512
      %78 = vsyncadd [#allocation4], %s77
      %s80 = sshll.u32 [#allocation8], 4
      %s81 = int_to_ptr.vmem [resolvable:$true] %s80
      %83 = dma.vmem_to_hbm [thread:$0]  %s81, 512, %s3, [#allocation4]
    $region29: #{tpu_custom_call.1} parent=1 // pred_fallthru
      _
    // Predicated region
    $region30: #{tpu_custom_call.1} parent=1 // pred_check
      _
    $region31: #{tpu_custom_call.1} parent=1 // pred_check_branch
      %85 = sbr.rel (0) target = $region33
    $region32: #{tpu_custom_call.1} parent=1 // pred_region
      %86 = dma.done [#allocation4], 512
    $region33: #{tpu_custom_call.1} parent=1 // pred_fallthru
      _
    %87 = vsyncpa [#allocation3], 1
    %88 = vsyncpa [#allocation6], 1
    %89 = vsyncpa [#allocation4], 1

</llo_original>
